<compile_context>
chip_gen: v5e
topology: v5e:2x2
jax: 0.10.0
libtpu: 0.0.40
codegen_flags: <defaults>
</compile_context>

<pallas_src>
import jax
import jax.numpy as jnp
from jax.experimental import pallas as pl
from jax.experimental.pallas import tpu as pltpu

_LANE = 128       # vreg lane width
_SUBLANE = 8      # vreg sublane count (f32)
_NEG_BIG = -1e30  # mask value for padded output lanes (exp underflows to exactly 0)


def _round_up(n, m):
    return ((n + m - 1) // m) * m


def net_kernel(x_ref, w1_ref, b1_ref, w2_ref, b2_ref, o_ref):
    # fc1: [tb, D_in] @ [D_in, H] + [1, H]; dropout (eval mode) is identity; ReLU.
    h = jnp.dot(x_ref[...], w1_ref[...], preferred_element_type=jnp.float32)
    h = jnp.maximum(h + b1_ref[...], 0.0)
    # fc2: [tb, H] @ [H, D_out_p] + [1, D_out_p]; padded lanes of b2 carry -1e30,
    # so after exp they are exactly 0 and softmax normalizes over real lanes only.
    logits = jnp.dot(h, w2_ref[...], preferred_element_type=jnp.float32) + b2_ref[...]
    # Numerically stable softmax over dim=1 (feature axis == lane axis).
    m = jnp.max(logits, axis=-1, keepdims=True)
    e = jnp.exp(logits - m)
    denom = jnp.sum(e, axis=-1, keepdims=True)
    # Exact divide (single column) so probability rows sum to 1.
    o_ref[...] = (e / denom).astype(o_ref.dtype)


def prepare_params(w1_t, b1, w2_t, b2):
    """One-time parameter preparation (call at init, NOT per step).

    w1_t: [D_in, H]; b1: [H]; w2_t: [H, D_out]; b2: [D_out].
    Only the output feature dim is padded to the 128-lane width; the padded
    b2 lanes carry -1e30 so the in-kernel softmax ignores them.
    """
    f32 = jnp.float32
    d_in, h = w1_t.shape
    h2, d_out = w2_t.shape
    assert h == h2
    d_out_p = _round_up(d_out, _LANE)

    w1_p = w1_t.astype(f32)                      # (D_in, H) -- no padding
    b1_p = b1.astype(f32).reshape(1, h)          # (1, H)
    w2_p = jnp.zeros((h, d_out_p), f32).at[:, :d_out].set(w2_t.astype(f32))
    b2_p = jnp.full((1, d_out_p), _NEG_BIG, f32).at[0, :d_out].set(b2.astype(f32))
    return {"w1": w1_p, "b1": b1_p, "w2": w2_p, "b2": b2_p, "d_out": d_out}


def net_forward(x, params, *, block_b=None):
    """Batched Net forward. x: [B, D_in] -> softmax probabilities [B, D_out] (f32).

    block_b=None -> single grid step (best on 1-TC chips, v5e/v6e).
    block_b=ceil(B/2) -> 2 parallel tiles (v7x dual-TensorCore scaling knob).
    """
    w1_p, b1_p, w2_p, b2_p = params["w1"], params["b1"], params["w2"], params["b2"]
    d_out = params["d_out"]

    B, d_in = x.shape
    h = w1_p.shape[1]
    d_out_p = w2_p.shape[1]

    b_rounded = _round_up(B, _SUBLANE)
    if block_b is None:
        tb = b_rounded
    else:
        tb = min(_round_up(block_b, _SUBLANE), b_rounded)
    b_p = _round_up(B, tb)

    x = x.astype(jnp.float32)
    if b_p != B:
        # Only copies when the batch itself needs sublane/tile padding.
        x = jnp.zeros((b_p, d_in), jnp.float32).at[:B].set(x)

    grid = (b_p // tb,)

    # Real (unpadded) work: only x and out stream per call; weights are tiny
    # and VMEM-resident.
    cost = pl.CostEstimate(
        flops=2 * B * (d_in * h + h * d_out),
        transcendentals=B * d_out,
        bytes_accessed=4 * (B * d_in + B * d_out),
    )

    out_p = pl.pallas_call(
        net_kernel,
        out_shape=jax.ShapeDtypeStruct((b_p, d_out_p), jnp.float32),
        grid=grid,
        in_specs=[
            # Only x streams with the grid; weights/biases use constant
            # index_maps -> fetched once, VMEM-resident across grid steps.
            pl.BlockSpec((tb, d_in), lambda i: (i, 0)),
            pl.BlockSpec((d_in, h), lambda i: (0, 0)),
            pl.BlockSpec((1, h), lambda i: (0, 0)),
            pl.BlockSpec((h, d_out_p), lambda i: (0, 0)),
            pl.BlockSpec((1, d_out_p), lambda i: (0, 0)),
        ],
        out_specs=pl.BlockSpec((tb, d_out_p), lambda i: (i, 0)),
        compiler_params=pltpu.CompilerParams(
            dimension_semantics=("parallel",)),
        cost_estimate=cost,
    )(x, w1_p, b1_p, w2_p, b2_p)

    # Padded lanes are exactly 0 probability; slice them away for the caller.
    # (A consumer that can read the padded [B, 128] block directly may skip this.)
    return out_p[:B, :d_out]


def net_forward_ref(x, w1_t, b1, w2_t, b2):
    h = jnp.maximum(x @ w1_t + b1, 0.0)
    logits = h @ w2_t + b2
    return jax.nn.softmax(logits, axis=1)


if __name__ == "__main__":
    # Shapes consistent with the module: Linear(in, hidden), Linear(hidden, out).
    batch = 256
    input_feature = 16
    hidden_feature = 32
    output_feature = 4

    key = jax.random.PRNGKey(0)
    kx, kw1, kb1, kw2, kb2 = jax.random.split(key, 5)

    x = jax.random.normal(kx, (batch, input_feature), dtype=jnp.float32)

    # Deterministic synthetic parameters (nn.Linear-style uniform fan-in bound).
    bound1 = 1.0 / (input_feature ** 0.5)
    w1_t = jax.random.uniform(kw1, (input_feature, hidden_feature),
                              minval=-bound1, maxval=bound1, dtype=jnp.float32)
    b1 = jax.random.uniform(kb1, (hidden_feature,),
                            minval=-bound1, maxval=bound1, dtype=jnp.float32)

    bound2 = 1.0 / (hidden_feature ** 0.5)
    w2_t = jax.random.uniform(kw2, (hidden_feature, output_feature),
                              minval=-bound2, maxval=bound2, dtype=jnp.float32)
    b2 = jax.random.uniform(kb2, (output_feature,),
                            minval=-bound2, maxval=bound2, dtype=jnp.float32)

    # One-time parameter prep (hoisted out of the per-step path).
    params = prepare_params(w1_t, b1, w2_t, b2)

    out = net_forward(x, params)
    out = jax.block_until_ready(out)

    ref = net_forward_ref(x, w1_t, b1, w2_t, b2)
    assert out.shape == (batch, output_feature)
    assert jnp.allclose(out, ref, atol=2e-3, rtol=2e-3), "mismatch vs reference"
    # Exact divide in the kernel -> rows sum to 1 to f32 accuracy.
    assert jnp.allclose(jnp.sum(out, axis=1), 1.0, atol=1e-4), "softmax rows must sum to 1"

    print("KERNEL_OK")
</pallas_src>

<mosaic_0001>
module attributes {stable_mosaic.version = 11 : i64} {
  func.func @net_kernel(%arg0: i32, %arg1: memref<256x16xf32, #tpu.memory_space<vmem>>, %arg2: memref<16x32xf32, #tpu.memory_space<vmem>>, %arg3: memref<1x32xf32, #tpu.memory_space<vmem>>, %arg4: memref<32x128xf32, #tpu.memory_space<vmem>>, %arg5: memref<1x128xf32, #tpu.memory_space<vmem>>, %arg6: memref<256x128xf32, #tpu.memory_space<vmem>>) attributes {dimension_semantics = [#tpu.dimension_semantics<parallel>], iteration_bounds = array<i64: 1>, scalar_prefetch = 0 : i64, scratch_operands = 0 : i64, tpu.core_type = #tpu.core_type<tc>, window_params = [{transform_indices = @transform_0, window_bounds = array<i64: 256, 16>}, {pipeline_mode = #tpu.pipeline_mode<synchronous>, transform_indices = @transform_1, window_bounds = array<i64: 16, 32>}, {pipeline_mode = #tpu.pipeline_mode<synchronous>, transform_indices = @transform_2, window_bounds = array<i64: 1, 32>}, {pipeline_mode = #tpu.pipeline_mode<synchronous>, transform_indices = @transform_3, window_bounds = array<i64: 32, 128>}, {pipeline_mode = #tpu.pipeline_mode<synchronous>, transform_indices = @transform_4, window_bounds = array<i64: 1, 128>}, {transform_indices = @transform_5, window_bounds = array<i64: 256, 128>}]} {
    %c0 = arith.constant 0 : index
    %c0_0 = arith.constant 0 : index
    %0 = vector.load %arg1[%c0, %c0_0] : memref<256x16xf32, #tpu.memory_space<vmem>>, vector<256x16xf32>
    %c0_1 = arith.constant 0 : index
    %c0_2 = arith.constant 0 : index
    %1 = vector.load %arg2[%c0_1, %c0_2] : memref<16x32xf32, #tpu.memory_space<vmem>>, vector<16x32xf32>
    %cst = arith.constant dense<0.000000e+00> : vector<256x32xf32>
    %2 = tpu.matmul %0, %1, %cst {dimension_numbers = #tpu.dot_dimension_numbers<[1], [0], [0], [1], [0, 0, 1, 1], [], []>} : vector<256x16xf32>, vector<16x32xf32>, vector<256x32xf32> -> vector<256x32xf32>
    %c0_3 = arith.constant 0 : index
    %c0_4 = arith.constant 0 : index
    %3 = vector.load %arg3[%c0_3, %c0_4] : memref<1x32xf32, #tpu.memory_space<vmem>>, vector<1x32xf32>
    %4 = vector.broadcast %3 : vector<1x32xf32> to vector<256x32xf32>
    %5 = arith.addf %2, %4 : vector<256x32xf32>
    %cst_5 = arith.constant 0.000000e+00 : f32
    %6 = vector.broadcast %cst_5 : f32 to vector<256x32xf32>
    %7 = arith.maximumf %5, %6 : vector<256x32xf32>
    %c0_6 = arith.constant 0 : index
    %c0_7 = arith.constant 0 : index
    %8 = vector.load %arg4[%c0_6, %c0_7] : memref<32x128xf32, #tpu.memory_space<vmem>>, vector<32x128xf32>
    %cst_8 = arith.constant dense<0.000000e+00> : vector<256x128xf32>
    %9 = tpu.matmul %7, %8, %cst_8 {dimension_numbers = #tpu.dot_dimension_numbers<[1], [0], [0], [1], [0, 0, 1, 1], [], []>} : vector<256x32xf32>, vector<32x128xf32>, vector<256x128xf32> -> vector<256x128xf32>
    %c0_9 = arith.constant 0 : index
    %c0_10 = arith.constant 0 : index
    %10 = vector.load %arg5[%c0_9, %c0_10] : memref<1x128xf32, #tpu.memory_space<vmem>>, vector<1x128xf32>
    %11 = vector.broadcast %10 : vector<1x128xf32> to vector<256x128xf32>
    %12 = arith.addf %9, %11 : vector<256x128xf32>
    %cst_11 = arith.constant dense<0xFF800000> : vector<256xf32>
    %13 = vector.multi_reduction <maximumf>, %12, %cst_11 [1] : vector<256x128xf32> to vector<256xf32>
    %14 = vector.shape_cast %13 : vector<256xf32> to vector<256x1xf32>
    %15 = vector.broadcast %14 : vector<256x1xf32> to vector<256x128xf32>
    %16 = arith.subf %12, %15 : vector<256x128xf32>
    %17 = math.exp %16 : vector<256x128xf32>
    %cst_12 = arith.constant dense<0.000000e+00> : vector<256xf32>
    %18 = vector.multi_reduction <add>, %17, %cst_12 [1] : vector<256x128xf32> to vector<256xf32>
    %19 = vector.shape_cast %18 : vector<256xf32> to vector<256x1xf32>
    %20 = vector.broadcast %19 : vector<256x1xf32> to vector<256x128xf32>
    %21 = arith.divf %17, %20 : vector<256x128xf32>
    %c0_13 = arith.constant 0 : index
    %c0_14 = arith.constant 0 : index
    %22 = vector.load %arg6[%c0_13, %c0_14] : memref<256x128xf32, #tpu.memory_space<vmem>>, vector<256x128xf32>
    tpu.vector_store %arg6[%c0_13, %c0_14], %21 {strides = array<i32>} : memref<256x128xf32, #tpu.memory_space<vmem>>, vector<256x128xf32>,
    return
  }
  func.func @transform_0(%arg0: i32) -> (i32, i32) {
    %c0_i32 = arith.constant 0 : i32
    %c0_i32_0 = arith.constant 0 : i32
    return %arg0, %c0_i32 : i32, i32
  }
  func.func @transform_1(%arg0: i32) -> (i32, i32) {
    %c0_i32 = arith.constant 0 : i32
    %c0_i32_0 = arith.constant 0 : i32
    %c0_i32_1 = arith.constant 0 : i32
    return %c0_i32, %c0_i32_0 : i32, i32
  }
  func.func @transform_2(%arg0: i32) -> (i32, i32) {
    %c0_i32 = arith.constant 0 : i32
    %c0_i32_0 = arith.constant 0 : i32
    %c0_i32_1 = arith.constant 0 : i32
    return %c0_i32, %c0_i32_0 : i32, i32
  }
  func.func @transform_3(%arg0: i32) -> (i32, i32) {
    %c0_i32 = arith.constant 0 : i32
    %c0_i32_0 = arith.constant 0 : i32
    %c0_i32_1 = arith.constant 0 : i32
    return %c0_i32, %c0_i32_0 : i32, i32
  }
  func.func @transform_4(%arg0: i32) -> (i32, i32) {
    %c0_i32 = arith.constant 0 : i32
    %c0_i32_0 = arith.constant 0 : i32
    %c0_i32_1 = arith.constant 0 : i32
    return %c0_i32, %c0_i32_0 : i32, i32
  }
  func.func @transform_5(%arg0: i32) -> (i32, i32) {
    %c0_i32 = arith.constant 0 : i32
    %c0_i32_0 = arith.constant 0 : i32
    return %arg0, %c0_i32 : i32, i32
  }
}

</mosaic_0001>

<llo_original>
// kernel: tpu_custom_call.1
$region0: #{tpu_custom_call.1}
  #allocation0 [shape = 'u32[]', space=smem, size = 0x4, offset = 0x4, fixed_abs, tag = 'smem constant byte address 0x4 - core index']
  #allocation1 [shape = 'u32[72,128]{1,0:T(1,128)}', space=vmem, size = 0x9000, scoped, tag = 'internal scratch']
  %s0 = inlined_call_operand.vmem [shape: f32[256,16], index: 0, kind: input, shape index: {}]
  %s1 = inlined_call_operand.vmem [shape: f32[16,32], index: 1, kind: input, shape index: {}]
  %s2 = inlined_call_operand.vmem [shape: f32[1,32], index: 2, kind: input, shape index: {}]
  %s3 = inlined_call_operand.vmem [shape: f32[32,128], index: 3, kind: input, shape index: {}]
  %s4 = inlined_call_operand.vmem [shape: f32[1,128], index: 4, kind: input, shape index: {}]
  %s5 = inlined_call_operand.hbm [shape: f32[256,128], index: 5, kind: output, shape index: {}]
  %s6 = sld [smem:[#allocation0]]
  $region30: #{tpu_custom_call.1} parent=0
    _
  %s8 = ssub.s32 1, %s6
  %s9 = scalar_select 0, %s8, %s6
  $region1: #{tpu_custom_call.1} parent=0
    #allocation2 [shape = 'u8[131072]{0}', space=vmem, size = 0x20000, scoped, tag = 'output window, operand 0, single buffered']
    #allocation3 [shape = 's32[1]{0}', space=sflag, size = 0x4, scoped, tag = 'scoped memory for tpu_custom_call.1']
    %10 = vsyncpa [#allocation3], 0
    // Predicated region
    $region2: #{tpu_custom_call.1} parent=1 // pred_check
      _
    $region3: #{tpu_custom_call.1} parent=1 // pred_check_branch
      %12 = sbr.rel (0) target = $region5
    $region4: #{tpu_custom_call.1} parent=1 // pred_region
      _
    $region5: #{tpu_custom_call.1} parent=1 // pred_fallthru
      _
    // Predicated region
    $region6: #{tpu_custom_call.1} parent=1 // pred_check
      _
    $region7: #{tpu_custom_call.1} parent=1 // pred_check_branch
      %14 = sbr.rel (0) target = $region9
    $region8: #{tpu_custom_call.1} parent=1 // pred_region
      _
    $region9: #{tpu_custom_call.1} parent=1 // pred_fallthru
      _
    // Predicated region
    $region10: #{tpu_custom_call.1} parent=1 // pred_check
      _
    $region11: #{tpu_custom_call.1} parent=1 // pred_check_branch
      %16 = sbr.rel (0) target = $region13
    $region12: #{tpu_custom_call.1} parent=1 // pred_region
      _
    $region13: #{tpu_custom_call.1} parent=1 // pred_fallthru
      _
    // Predicated region
    $region14: #{tpu_custom_call.1} parent=1 // pred_check
      _
    $region15: #{tpu_custom_call.1} parent=1 // pred_check_branch
      %18 = sbr.rel (0) target = $region17
    $region16: #{tpu_custom_call.1} parent=1 // pred_region
      _
    $region17: #{tpu_custom_call.1} parent=1 // pred_fallthru
      _
    // Predicated region
    $region18: #{tpu_custom_call.1} parent=1 // pred_check
      _
    $region19: #{tpu_custom_call.1} parent=1 // pred_check_branch
      %20 = sbr.rel (0) target = $region21
    $region20: #{tpu_custom_call.1} parent=1 // pred_region
      _
    $region21: #{tpu_custom_call.1} parent=1 // pred_fallthru
      _
    %v21 = vld [vmem:[%s0] sm:$0xff]
    %v22 = vld [vmem:[%s0 + $0x8] sm:$0xff]
    %v23 = vld [vmem:[%s0 + $0x10] sm:$0xff]
    %v24 = vld [vmem:[%s0 + $0x18] sm:$0xff]
    %v25 = vld [vmem:[%s0 + $0x20] sm:$0xff]
    %v26 = vld [vmem:[%s0 + $0x28] sm:$0xff]
    %v27 = vld [vmem:[%s0 + $0x30] sm:$0xff]
    %v28 = vld [vmem:[%s0 + $0x38] sm:$0xff]
    %v29 = vld [vmem:[%s0 + $0x40] sm:$0xff]
    %v30 = vld [vmem:[%s0 + $0x48] sm:$0xff]
    %v31 = vld [vmem:[%s0 + $0x50] sm:$0xff]
    %v32 = vld [vmem:[%s0 + $0x58] sm:$0xff]
    %v33 = vld [vmem:[%s0 + $0x60] sm:$0xff]
    %v34 = vld [vmem:[%s0 + $0x68] sm:$0xff]
    %v35 = vld [vmem:[%s0 + $0x70] sm:$0xff]
    %v36 = vld [vmem:[%s0 + $0x78] sm:$0xff]
    %v37 = vld [vmem:[%s0 + $0x80] sm:$0xff]
    %v38 = vld [vmem:[%s0 + $0x88] sm:$0xff]
    %v39 = vld [vmem:[%s0 + $0x90] sm:$0xff]
    %v40 = vld [vmem:[%s0 + $0x98] sm:$0xff]
    %v41 = vld [vmem:[%s0 + $0xa0] sm:$0xff]
    %v42 = vld [vmem:[%s0 + $0xa8] sm:$0xff]
    %v43 = vld [vmem:[%s0 + $0xb0] sm:$0xff]
    %v44 = vld [vmem:[%s0 + $0xb8] sm:$0xff]
    %v45 = vld [vmem:[%s0 + $0xc0] sm:$0xff]
    %v46 = vld [vmem:[%s0 + $0xc8] sm:$0xff]
    %v47 = vld [vmem:[%s0 + $0xd0] sm:$0xff]
    %v48 = vld [vmem:[%s0 + $0xd8] sm:$0xff]
    %v49 = vld [vmem:[%s0 + $0xe0] sm:$0xff]
    %v50 = vld [vmem:[%s0 + $0xe8] sm:$0xff]
    %v51 = vld [vmem:[%s0 + $0xf0] sm:$0xff]
    %v52 = vld [vmem:[%s0 + $0xf8] sm:$0xff]
    %v53 = vld [vmem:[%s1] sm:$0xff]
    %v54 = vld [vmem:[%s1 + $0x8] sm:$0xff]
    %v55 = vld [vmem:[%s2] sm:$0x1]
    %v57 = vperm.slane %v55, 0
    %vm59 = vcmask 130048
    %v61 = vsel %vm59, %v21, 0
    %v64 = vsel %vm59, %v22, 0
    %v67 = vsel %vm59, %v23, 0
    %v70 = vsel %vm59, %v24, 0
    %v73 = vsel %vm59, %v25, 0
    %v76 = vsel %vm59, %v26, 0
    %v79 = vsel %vm59, %v27, 0
    %v82 = vsel %vm59, %v28, 0
    %v85 = vsel %vm59, %v29, 0
    %v88 = vsel %vm59, %v30, 0
    %v91 = vsel %vm59, %v31, 0
    %v94 = vsel %vm59, %v32, 0
    %v97 = vsel %vm59, %v33, 0
    %v100 = vsel %vm59, %v34, 0
    %v103 = vsel %vm59, %v35, 0
    %v106 = vsel %vm59, %v36, 0
    %v109 = vsel %vm59, %v37, 0
    %v112 = vsel %vm59, %v38, 0
    %v115 = vsel %vm59, %v39, 0
    %v118 = vsel %vm59, %v40, 0
    %v121 = vsel %vm59, %v41, 0
    %v124 = vsel %vm59, %v42, 0
    %v127 = vsel %vm59, %v43, 0
    %v130 = vsel %vm59, %v44, 0
    %v133 = vsel %vm59, %v45, 0
    %v136 = vsel %vm59, %v46, 0
    %v139 = vsel %vm59, %v47, 0
    %v142 = vsel %vm59, %v48, 0
    %v145 = vsel %vm59, %v49, 0
    %v148 = vsel %vm59, %v50, 0
    %v151 = vsel %vm59, %v51, 0
    %v154 = vsel %vm59, %v52, 0
    %156 = vmatpush.msra.mxu0 0.0
    %157 = vmatpush.msra.mxu0 0.0
    %158 = vmatpush.msra.mxu0 0.0
    %159 = vmatpush.msra.mxu0 0.0
    %160 = vmatpush.msra.mxu0 0.0
    %161 = vmatpush.msra.mxu0 0.0
    %162 = vmatpush.msra.mxu0 0.0
    %163 = vmatpush.msra.mxu0 0.0
    %164 = vmatpush.msra.mxu0 0.0
    %165 = vmatpush.msra.mxu0 0.0
    %166 = vmatpush.msra.mxu0 0.0
    %167 = vmatpush.msra.mxu0 0.0
    %168 = vmatpush.msra.mxu0 0.0
    %169 = vmatpush.msra.mxu0 0.0
    %170 = vmatpush.msra.mxu0 %v54
    %171 = vmatpush.msra.mxu0 %v53
    %172 = vmatmul.f32.gmra.mxu0 %v61
    %v173 = vpop.f32.mrf.mxu0
    %v174 = vadd.f32 %v57, %v173
    %175 = vmatmul.f32.gmra.mxu0 %v64
    %v176 = vpop.f32.mrf.mxu0
    %v177 = vadd.f32 %v57, %v176
    %178 = vmatmul.f32.gmra.mxu0 %v67
    %v179 = vpop.f32.mrf.mxu0
    %v180 = vadd.f32 %v57, %v179
    %181 = vmatmul.f32.gmra.mxu0 %v70
    %v182 = vpop.f32.mrf.mxu0
    %v183 = vadd.f32 %v57, %v182
    %184 = vmatmul.f32.gmra.mxu0 %v73
    %v185 = vpop.f32.mrf.mxu0
    %v186 = vadd.f32 %v57, %v185
    %187 = vmatmul.f32.gmra.mxu0 %v76
    %v188 = vpop.f32.mrf.mxu0
    %v189 = vadd.f32 %v57, %v188
    %190 = vmatmul.f32.gmra.mxu0 %v79
    %v191 = vpop.f32.mrf.mxu0
    %v192 = vadd.f32 %v57, %v191
    %193 = vmatmul.f32.gmra.mxu0 %v82
    %v194 = vpop.f32.mrf.mxu0
    %v195 = vadd.f32 %v57, %v194
    %196 = vmatmul.f32.gmra.mxu0 %v85
    %v197 = vpop.f32.mrf.mxu0
    %v198 = vadd.f32 %v57, %v197
    %199 = vmatmul.f32.gmra.mxu0 %v88
    %v200 = vpop.f32.mrf.mxu0
    %v201 = vadd.f32 %v57, %v200
    %202 = vmatmul.f32.gmra.mxu0 %v91
    %v203 = vpop.f32.mrf.mxu0
    %v204 = vadd.f32 %v57, %v203
    %205 = vmatmul.f32.gmra.mxu0 %v94
    %v206 = vpop.f32.mrf.mxu0
    %v207 = vadd.f32 %v57, %v206
    %208 = vmatmul.f32.gmra.mxu0 %v97
    %v209 = vpop.f32.mrf.mxu0
    %v210 = vadd.f32 %v57, %v209
    %211 = vmatmul.f32.gmra.mxu0 %v100
    %v212 = vpop.f32.mrf.mxu0
    %v213 = vadd.f32 %v57, %v212
    %214 = vmatmul.f32.gmra.mxu0 %v103
    %v215 = vpop.f32.mrf.mxu0
    %v216 = vadd.f32 %v57, %v215
    %217 = vmatmul.f32.gmra.mxu0 %v106
    %v218 = vpop.f32.mrf.mxu0
    %v219 = vadd.f32 %v57, %v218
    %220 = vmatmul.f32.gmra.mxu0 %v109
    %v221 = vpop.f32.mrf.mxu0
    %v222 = vadd.f32 %v57, %v221
    %223 = vmatmul.f32.gmra.mxu0 %v112
    %v224 = vpop.f32.mrf.mxu0
    %v225 = vadd.f32 %v57, %v224
    %226 = vmatmul.f32.gmra.mxu0 %v115
    %v227 = vpop.f32.mrf.mxu0
    %v228 = vadd.f32 %v57, %v227
    %229 = vmatmul.f32.gmra.mxu0 %v118
    %v230 = vpop.f32.mrf.mxu0
    %v231 = vadd.f32 %v57, %v230
    %232 = vmatmul.f32.gmra.mxu0 %v121
    %v233 = vpop.f32.mrf.mxu0
    %v234 = vadd.f32 %v57, %v233
    %235 = vmatmul.f32.gmra.mxu0 %v124
    %v236 = vpop.f32.mrf.mxu0
    %v237 = vadd.f32 %v57, %v236
    %238 = vmatmul.f32.gmra.mxu0 %v127
    %v239 = vpop.f32.mrf.mxu0
    %v240 = vadd.f32 %v57, %v239
    %241 = vmatmul.f32.gmra.mxu0 %v130
    %v242 = vpop.f32.mrf.mxu0
    %v243 = vadd.f32 %v57, %v242
    %244 = vmatmul.f32.gmra.mxu0 %v133
    %v245 = vpop.f32.mrf.mxu0
    %v246 = vadd.f32 %v57, %v245
    %247 = vmatmul.f32.gmra.mxu0 %v136
    %v248 = vpop.f32.mrf.mxu0
    %v249 = vadd.f32 %v57, %v248
    %250 = vmatmul.f32.gmra.mxu0 %v139
    %v251 = vpop.f32.mrf.mxu0
    %v252 = vadd.f32 %v57, %v251
    %253 = vmatmul.f32.gmra.mxu0 %v142
    %v254 = vpop.f32.mrf.mxu0
    %v255 = vadd.f32 %v57, %v254
    %256 = vmatmul.f32.gmra.mxu0 %v145
    %v257 = vpop.f32.mrf.mxu0
    %v258 = vadd.f32 %v57, %v257
    %259 = vmatmul.f32.gmra.mxu0 %v148
    %v260 = vpop.f32.mrf.mxu0
    %v261 = vadd.f32 %v57, %v260
    %262 = vmatmul.f32.gmra.mxu0 %v151
    %v263 = vpop.f32.mrf.mxu0
    %v264 = vadd.f32 %v57, %v263
    %265 = vmatmul.f32.gmra.mxu0 %v154
    %v266 = vpop.f32.mrf.mxu0
    %v267 = vadd.f32 %v57, %v266
    %268 = vdwg.mxu0
    %v269 = vmax.f32 %v174, 0.0
    %v270 = vmax.f32 %v177, 0.0
    %v271 = vmax.f32 %v180, 0.0
    %v272 = vmax.f32 %v183, 0.0
    %v273 = vmax.f32 %v186, 0.0
    %v274 = vmax.f32 %v189, 0.0
    %v275 = vmax.f32 %v192, 0.0
    %v276 = vmax.f32 %v195, 0.0
    %v277 = vmax.f32 %v198, 0.0
    %v278 = vmax.f32 %v201, 0.0
    %v279 = vmax.f32 %v204, 0.0
    %v280 = vmax.f32 %v207, 0.0
    %v281 = vmax.f32 %v210, 0.0
    %v282 = vmax.f32 %v213, 0.0
    %v283 = vmax.f32 %v216, 0.0
    %v284 = vmax.f32 %v219, 0.0
    %v285 = vmax.f32 %v222, 0.0
    %v286 = vmax.f32 %v225, 0.0
    %v287 = vmax.f32 %v228, 0.0
    %v288 = vmax.f32 %v231, 0.0
    %v289 = vmax.f32 %v234, 0.0
    %v290 = vmax.f32 %v237, 0.0
    %v291 = vmax.f32 %v240, 0.0
    %v292 = vmax.f32 %v243, 0.0
    %v293 = vmax.f32 %v246, 0.0
    %v294 = vmax.f32 %v249, 0.0
    %v295 = vmax.f32 %v252, 0.0
    %v296 = vmax.f32 %v255, 0.0
    %v297 = vmax.f32 %v258, 0.0
    %v298 = vmax.f32 %v261, 0.0
    %v299 = vmax.f32 %v264, 0.0
    %v300 = vmax.f32 %v267, 0.0
    %v301 = vld [vmem:[%s3] sm:$0xff]
    %v302 = vld [vmem:[%s3 + $0x8] sm:$0xff]
    %v303 = vld [vmem:[%s3 + $0x10] sm:$0xff]
    %v304 = vld [vmem:[%s3 + $0x18] sm:$0xff]
    %v305 = vld [vmem:[%s4] sm:$0x1]
    %v307 = vperm.slane %v305, 0
    %vm309 = vcmask 261120
    %v311 = vsel %vm309, %v269, 0
    %v314 = vsel %vm309, %v270, 0
    %v317 = vsel %vm309, %v271, 0
    %v320 = vsel %vm309, %v272, 0
    %v323 = vsel %vm309, %v273, 0
    %v326 = vsel %vm309, %v274, 0
    %v329 = vsel %vm309, %v275, 0
    %v332 = vsel %vm309, %v276, 0
    %v335 = vsel %vm309, %v277, 0
    %v338 = vsel %vm309, %v278, 0
    %v341 = vsel %vm309, %v279, 0
    %v344 = vsel %vm309, %v280, 0
    %v347 = vsel %vm309, %v281, 0
    %v350 = vsel %vm309, %v282, 0
    %v353 = vsel %vm309, %v283, 0
    %v356 = vsel %vm309, %v284, 0
    %v359 = vsel %vm309, %v285, 0
    %v362 = vsel %vm309, %v286, 0
    %v365 = vsel %vm309, %v287, 0
    %v368 = vsel %vm309, %v288, 0
    %v371 = vsel %vm309, %v289, 0
    %v374 = vsel %vm309, %v290, 0
    %v377 = vsel %vm309, %v291, 0
    %v380 = vsel %vm309, %v292, 0
    %v383 = vsel %vm309, %v293, 0
    %v386 = vsel %vm309, %v294, 0
    %v389 = vsel %vm309, %v295, 0
    %v392 = vsel %vm309, %v296, 0
    %v395 = vsel %vm309, %v297, 0
    %v398 = vsel %vm309, %v298, 0
    %v401 = vsel %vm309, %v299, 0
    %v404 = vsel %vm309, %v300, 0
    %406 = vmatpush.msra.mxu0 0.0
    %407 = vmatpush.msra.mxu0 0.0
    %408 = vmatpush.msra.mxu0 0.0
    %409 = vmatpush.msra.mxu0 0.0
    %410 = vmatpush.msra.mxu0 0.0
    %411 = vmatpush.msra.mxu0 0.0
    %412 = vmatpush.msra.mxu0 0.0
    %413 = vmatpush.msra.mxu0 0.0
    %414 = vmatpush.msra.mxu0 0.0
    %415 = vmatpush.msra.mxu0 0.0
    %416 = vmatpush.msra.mxu0 0.0
    %417 = vmatpush.msra.mxu0 0.0
    %418 = vmatpush.msra.mxu0 %v304
    %419 = vmatpush.msra.mxu0 %v303
    %420 = vmatpush.msra.mxu0 %v302
    %421 = vmatpush.msra.mxu0 %v301
    %422 = vmatmul.f32.gmra.mxu0 %v311
    %v423 = vpop.f32.mrf.mxu0
    %v424 = vadd.f32 %v307, %v423
    %425 = vmatmul.f32.gmra.mxu0 %v314
    %v426 = vpop.f32.mrf.mxu0
    %v427 = vadd.f32 %v307, %v426
    %428 = vmatmul.f32.gmra.mxu0 %v317
    %v429 = vpop.f32.mrf.mxu0
    %v430 = vadd.f32 %v307, %v429
    %431 = vmatmul.f32.gmra.mxu0 %v320
    %v432 = vpop.f32.mrf.mxu0
    %v433 = vadd.f32 %v307, %v432
    %434 = vmatmul.f32.gmra.mxu0 %v323
    %v435 = vpop.f32.mrf.mxu0
    %v436 = vadd.f32 %v307, %v435
    %437 = vmatmul.f32.gmra.mxu0 %v326
    %v438 = vpop.f32.mrf.mxu0
    %v439 = vadd.f32 %v307, %v438
    %440 = vmatmul.f32.gmra.mxu0 %v329
    %v441 = vpop.f32.mrf.mxu0
    %v442 = vadd.f32 %v307, %v441
    %443 = vmatmul.f32.gmra.mxu0 %v332
    %v444 = vpop.f32.mrf.mxu0
    %v445 = vadd.f32 %v307, %v444
    %446 = vmatmul.f32.gmra.mxu0 %v335
    %v447 = vpop.f32.mrf.mxu0
    %v448 = vadd.f32 %v307, %v447
    %449 = vmatmul.f32.gmra.mxu0 %v338
    %v450 = vpop.f32.mrf.mxu0
    %v451 = vadd.f32 %v307, %v450
    %452 = vmatmul.f32.gmra.mxu0 %v341
    %v453 = vpop.f32.mrf.mxu0
    %v454 = vadd.f32 %v307, %v453
    %455 = vmatmul.f32.gmra.mxu0 %v344
    %v456 = vpop.f32.mrf.mxu0
    %v457 = vadd.f32 %v307, %v456
    %458 = vmatmul.f32.gmra.mxu0 %v347
    %v459 = vpop.f32.mrf.mxu0
    %v460 = vadd.f32 %v307, %v459
    %461 = vmatmul.f32.gmra.mxu0 %v350
    %v462 = vpop.f32.mrf.mxu0
    %v463 = vadd.f32 %v307, %v462
    %464 = vmatmul.f32.gmra.mxu0 %v353
    %v465 = vpop.f32.mrf.mxu0
    %v466 = vadd.f32 %v307, %v465
    %467 = vmatmul.f32.gmra.mxu0 %v356
    %v468 = vpop.f32.mrf.mxu0
    %v469 = vadd.f32 %v307, %v468
    %470 = vmatmul.f32.gmra.mxu0 %v359
    %v471 = vpop.f32.mrf.mxu0
    %v472 = vadd.f32 %v307, %v471
    %473 = vmatmul.f32.gmra.mxu0 %v362
    %v474 = vpop.f32.mrf.mxu0
    %v475 = vadd.f32 %v307, %v474
    %476 = vmatmul.f32.gmra.mxu0 %v365
    %v477 = vpop.f32.mrf.mxu0
    %v478 = vadd.f32 %v307, %v477
    %479 = vmatmul.f32.gmra.mxu0 %v368
    %v480 = vpop.f32.mrf.mxu0
    %v481 = vadd.f32 %v307, %v480
    %482 = vmatmul.f32.gmra.mxu0 %v371
    %v483 = vpop.f32.mrf.mxu0
    %v484 = vadd.f32 %v307, %v483
    %485 = vmatmul.f32.gmra.mxu0 %v374
    %v486 = vpop.f32.mrf.mxu0
    %v487 = vadd.f32 %v307, %v486
    %488 = vmatmul.f32.gmra.mxu0 %v377
    %v489 = vpop.f32.mrf.mxu0
    %v490 = vadd.f32 %v307, %v489
    %491 = vmatmul.f32.gmra.mxu0 %v380
    %v492 = vpop.f32.mrf.mxu0
    %v493 = vadd.f32 %v307, %v492
    %494 = vmatmul.f32.gmra.mxu0 %v383
    %v495 = vpop.f32.mrf.mxu0
    %v496 = vadd.f32 %v307, %v495
    %497 = vmatmul.f32.gmra.mxu0 %v386
    %v498 = vpop.f32.mrf.mxu0
    %v499 = vadd.f32 %v307, %v498
    %500 = vmatmul.f32.gmra.mxu0 %v389
    %v501 = vpop.f32.mrf.mxu0
    %v502 = vadd.f32 %v307, %v501
    %503 = vmatmul.f32.gmra.mxu0 %v392
    %v504 = vpop.f32.mrf.mxu0
    %v505 = vadd.f32 %v307, %v504
    %506 = vmatmul.f32.gmra.mxu0 %v395
    %v507 = vpop.f32.mrf.mxu0
    %v508 = vadd.f32 %v307, %v507
    %509 = vmatmul.f32.gmra.mxu0 %v398
    %v510 = vpop.f32.mrf.mxu0
    %v511 = vadd.f32 %v307, %v510
    %512 = vmatmul.f32.gmra.mxu0 %v401
    %v513 = vpop.f32.mrf.mxu0
    %v514 = vadd.f32 %v307, %v513
    %515 = vmatmul.f32.gmra.mxu0 %v404
    %v516 = vpop.f32.mrf.mxu0
    %v517 = vadd.f32 %v307, %v516
    %518 = vdwg.mxu0
    %519 = vmax.xlane.f32.xlu0 %v424
    %v520 = vpop.xlane.xlu0 %519
    %521 = vmax.xlane.f32.xlu0 %v427
    %v522 = vpop.xlane.xlu0 %521
    %523 = vmax.xlane.f32.xlu0 %v430
    %v524 = vpop.xlane.xlu0 %523
    %525 = vmax.xlane.f32.xlu0 %v433
    %v526 = vpop.xlane.xlu0 %525
    %527 = vmax.xlane.f32.xlu0 %v436
    %v528 = vpop.xlane.xlu0 %527
    %529 = vmax.xlane.f32.xlu0 %v439
    %v530 = vpop.xlane.xlu0 %529
    %531 = vmax.xlane.f32.xlu0 %v442
    %v532 = vpop.xlane.xlu0 %531
    %533 = vmax.xlane.f32.xlu0 %v445
    %v534 = vpop.xlane.xlu0 %533
    %535 = vmax.xlane.f32.xlu0 %v448
    %v536 = vpop.xlane.xlu0 %535
    %537 = vmax.xlane.f32.xlu0 %v451
    %v538 = vpop.xlane.xlu0 %537
    %539 = vmax.xlane.f32.xlu0 %v454
    %v540 = vpop.xlane.xlu0 %539
    %541 = vmax.xlane.f32.xlu0 %v457
    %v542 = vpop.xlane.xlu0 %541
    %543 = vmax.xlane.f32.xlu0 %v460
    %v544 = vpop.xlane.xlu0 %543
    %545 = vmax.xlane.f32.xlu0 %v463
    %v546 = vpop.xlane.xlu0 %545
    %547 = vmax.xlane.f32.xlu0 %v466
    %v548 = vpop.xlane.xlu0 %547
    %549 = vmax.xlane.f32.xlu0 %v469
    %v550 = vpop.xlane.xlu0 %549
    %551 = vmax.xlane.f32.xlu0 %v472
    %v552 = vpop.xlane.xlu0 %551
    %553 = vmax.xlane.f32.xlu0 %v475
    %v554 = vpop.xlane.xlu0 %553
    %555 = vmax.xlane.f32.xlu0 %v478
    %v556 = vpop.xlane.xlu0 %555
    %557 = vmax.xlane.f32.xlu0 %v481
    %v558 = vpop.xlane.xlu0 %557
    %559 = vmax.xlane.f32.xlu0 %v484
    %v560 = vpop.xlane.xlu0 %559
    %561 = vmax.xlane.f32.xlu0 %v487
    %v562 = vpop.xlane.xlu0 %561
    %563 = vmax.xlane.f32.xlu0 %v490
    %v564 = vpop.xlane.xlu0 %563
    %565 = vmax.xlane.f32.xlu0 %v493
    %v566 = vpop.xlane.xlu0 %565
    %567 = vmax.xlane.f32.xlu0 %v496
    %v568 = vpop.xlane.xlu0 %567
    %569 = vmax.xlane.f32.xlu0 %v499
    %v570 = vpop.xlane.xlu0 %569
    %571 = vmax.xlane.f32.xlu0 %v502
    %v572 = vpop.xlane.xlu0 %571
    %573 = vmax.xlane.f32.xlu0 %v505
    %v574 = vpop.xlane.xlu0 %573
    %575 = vmax.xlane.f32.xlu0 %v508
    %v576 = vpop.xlane.xlu0 %575
    %577 = vmax.xlane.f32.xlu0 %v511
    %v578 = vpop.xlane.xlu0 %577
    %579 = vmax.xlane.f32.xlu0 %v514
    %v580 = vpop.xlane.xlu0 %579
    %581 = vmax.xlane.f32.xlu0 %v517
    %v582 = vpop.xlane.xlu0 %581
    %v583 = vsub.f32 %v424, %v520
    %v584 = vsub.f32 %v427, %v522
    %v585 = vsub.f32 %v430, %v524
    %v586 = vsub.f32 %v433, %v526
    %v587 = vsub.f32 %v436, %v528
    %v588 = vsub.f32 %v439, %v530
    %v589 = vsub.f32 %v442, %v532
    %v590 = vsub.f32 %v445, %v534
    %v591 = vsub.f32 %v448, %v536
    %v592 = vsub.f32 %v451, %v538
    %v593 = vsub.f32 %v454, %v540
    %v594 = vsub.f32 %v457, %v542
    %v595 = vsub.f32 %v460, %v544
    %v596 = vsub.f32 %v463, %v546
    %v597 = vsub.f32 %v466, %v548
    %v598 = vsub.f32 %v469, %v550
    %v599 = vsub.f32 %v472, %v552
    %v600 = vsub.f32 %v475, %v554
    %v601 = vsub.f32 %v478, %v556
    %v602 = vsub.f32 %v481, %v558
    %v603 = vsub.f32 %v484, %v560
    %v604 = vsub.f32 %v487, %v562
    %v605 = vsub.f32 %v490, %v564
    %v606 = vsub.f32 %v493, %v566
    %v607 = vsub.f32 %v496, %v568
    %v608 = vsub.f32 %v499, %v570
    %v609 = vsub.f32 %v502, %v572
    %v610 = vsub.f32 %v505, %v574
    %v611 = vsub.f32 %v508, %v576
    %v612 = vsub.f32 %v511, %v578
    %v613 = vsub.f32 %v514, %v580
    %v614 = vsub.f32 %v517, %v582
    %v615 = vmul.f32 %v583, 1.442695
    %v616 = vpow.pop %v615
    %v617 = vmul.f32 %v584, 1.442695
    %v618 = vpow.pop %v617
    %v619 = vmul.f32 %v585, 1.442695
    %v620 = vpow.pop %v619
    %v621 = vmul.f32 %v586, 1.442695
    %v622 = vpow.pop %v621
    %v623 = vmul.f32 %v587, 1.442695
    %v624 = vpow.pop %v623
    %v625 = vmul.f32 %v588, 1.442695
    %v626 = vpow.pop %v625
    %v627 = vmul.f32 %v589, 1.442695
    %v628 = vpow.pop %v627
    %v629 = vmul.f32 %v590, 1.442695
    %v630 = vpow.pop %v629
    %v631 = vmul.f32 %v591, 1.442695
    %v632 = vpow.pop %v631
    %v633 = vmul.f32 %v592, 1.442695
    %v634 = vpow.pop %v633
    %v635 = vmul.f32 %v593, 1.442695
    %v636 = vpow.pop %v635
    %v637 = vmul.f32 %v594, 1.442695
    %v638 = vpow.pop %v637
    %v639 = vmul.f32 %v595, 1.442695
    %v640 = vpow.pop %v639
    %v641 = vmul.f32 %v596, 1.442695
    %v642 = vpow.pop %v641
    %v643 = vmul.f32 %v597, 1.442695
    %v644 = vpow.pop %v643
    %v645 = vmul.f32 %v598, 1.442695
    %v646 = vpow.pop %v645
    %v647 = vmul.f32 %v599, 1.442695
    %v648 = vpow.pop %v647
    %v649 = vmul.f32 %v600, 1.442695
    %v650 = vpow.pop %v649
    %v651 = vmul.f32 %v601, 1.442695
    %v652 = vpow.pop %v651
    %v653 = vmul.f32 %v602, 1.442695
    %v654 = vpow.pop %v653
    %v655 = vmul.f32 %v603, 1.442695
    %v656 = vpow.pop %v655
    %v657 = vmul.f32 %v604, 1.442695
    %v658 = vpow.pop %v657
    %v659 = vmul.f32 %v605, 1.442695
    %v660 = vpow.pop %v659
    %v661 = vmul.f32 %v606, 1.442695
    %v662 = vpow.pop %v661
    %v663 = vmul.f32 %v607, 1.442695
    %v664 = vpow.pop %v663
    %v665 = vmul.f32 %v608, 1.442695
    %v666 = vpow.pop %v665
    %v667 = vmul.f32 %v609, 1.442695
    %v668 = vpow.pop %v667
    %v669 = vmul.f32 %v610, 1.442695
    %v670 = vpow.pop %v669
    %v671 = vmul.f32 %v611, 1.442695
    %v672 = vpow.pop %v671
    %v673 = vmul.f32 %v612, 1.442695
    %v674 = vpow.pop %v673
    %v675 = vmul.f32 %v613, 1.442695
    %v676 = vpow.pop %v675
    %v677 = vmul.f32 %v614, 1.442695
    %v678 = vpow.pop %v677
    %679 = vadd.xlane.f32.xlu0 %v616
    %v680 = vpop.xlane.xlu0 %679
    %681 = vadd.xlane.f32.xlu0 %v618
    %v682 = vpop.xlane.xlu0 %681
    %683 = vadd.xlane.f32.xlu0 %v620
    %v684 = vpop.xlane.xlu0 %683
    %685 = vadd.xlane.f32.xlu0 %v622
    %v686 = vpop.xlane.xlu0 %685
    %687 = vadd.xlane.f32.xlu0 %v624
    %v688 = vpop.xlane.xlu0 %687
    %689 = vadd.xlane.f32.xlu0 %v626
    %v690 = vpop.xlane.xlu0 %689
    %691 = vadd.xlane.f32.xlu0 %v628
    %v692 = vpop.xlane.xlu0 %691
    %693 = vadd.xlane.f32.xlu0 %v630
    %v694 = vpop.xlane.xlu0 %693
    %695 = vadd.xlane.f32.xlu0 %v632
    %v696 = vpop.xlane.xlu0 %695
    %697 = vadd.xlane.f32.xlu0 %v634
    %v698 = vpop.xlane.xlu0 %697
    %699 = vadd.xlane.f32.xlu0 %v636
    %v700 = vpop.xlane.xlu0 %699
    %701 = vadd.xlane.f32.xlu0 %v638
    %v702 = vpop.xlane.xlu0 %701
    %703 = vadd.xlane.f32.xlu0 %v640
    %v704 = vpop.xlane.xlu0 %703
    %705 = vadd.xlane.f32.xlu0 %v642
    %v706 = vpop.xlane.xlu0 %705
    %707 = vadd.xlane.f32.xlu0 %v644
    %v708 = vpop.xlane.xlu0 %707
    %709 = vadd.xlane.f32.xlu0 %v646
    %v710 = vpop.xlane.xlu0 %709
    %711 = vadd.xlane.f32.xlu0 %v648
    %v712 = vpop.xlane.xlu0 %711
    %713 = vadd.xlane.f32.xlu0 %v650
    %v714 = vpop.xlane.xlu0 %713
    %715 = vadd.xlane.f32.xlu0 %v652
    %v716 = vpop.xlane.xlu0 %715
    %717 = vadd.xlane.f32.xlu0 %v654
    %v718 = vpop.xlane.xlu0 %717
    %719 = vadd.xlane.f32.xlu0 %v656
    %v720 = vpop.xlane.xlu0 %719
    %721 = vadd.xlane.f32.xlu0 %v658
    %v722 = vpop.xlane.xlu0 %721
    %723 = vadd.xlane.f32.xlu0 %v660
    %v724 = vpop.xlane.xlu0 %723
    %725 = vadd.xlane.f32.xlu0 %v662
    %v726 = vpop.xlane.xlu0 %725
    %727 = vadd.xlane.f32.xlu0 %v664
    %v728 = vpop.xlane.xlu0 %727
    %729 = vadd.xlane.f32.xlu0 %v666
    %v730 = vpop.xlane.xlu0 %729
    %731 = vadd.xlane.f32.xlu0 %v668
    %v732 = vpop.xlane.xlu0 %731
    %733 = vadd.xlane.f32.xlu0 %v670
    %v734 = vpop.xlane.xlu0 %733
    %735 = vadd.xlane.f32.xlu0 %v672
    %v736 = vpop.xlane.xlu0 %735
    %737 = vadd.xlane.f32.xlu0 %v674
    %v738 = vpop.xlane.xlu0 %737
    %739 = vadd.xlane.f32.xlu0 %v676
    %v740 = vpop.xlane.xlu0 %739
    %741 = vadd.xlane.f32.xlu0 %v678
    %v742 = vpop.xlane.xlu0 %741
    %v743 = vrcp.pop %v680
    %v744 = vmul.f32 %v680, %v743
    %v745 = vsub.f32 1.0, %v744
    %v746 = vmul.f32 %v743, %v745
    %v747 = vadd.f32 %v743, %v746
    %vm748 = vweird.f32 %v680
    %vm749 = vweird.f32 %v743
    %vm750 = vmor %vm748, %vm749
    %v751 = vsel %vm750, %v743, %v747
    %v752 = vand.u32 2147483647, %v680
    %vm753 = vcmp.eq.f32.partialorder %v752, 8.507059e+37
    %v754 = vand.u32 %v680, 2147483648
    %v755 = vor.u32 1.1754944e-38, %v754
    %v756 = vsel %vm753, %v755, %v751
    %v757 = vmul.f32 %v616, %v756
    %v758 = vrcp.pop %v682
    %v759 = vmul.f32 %v682, %v758
    %v760 = vsub.f32 1.0, %v759
    %v761 = vmul.f32 %v758, %v760
    %v762 = vadd.f32 %v758, %v761
    %vm763 = vweird.f32 %v682
    %vm764 = vweird.f32 %v758
    %vm765 = vmor %vm763, %vm764
    %v766 = vsel %vm765, %v758, %v762
    %v767 = vand.u32 2147483647, %v682
    %vm768 = vcmp.eq.f32.partialorder %v767, 8.507059e+37
    %v769 = vand.u32 %v682, 2147483648
    %v770 = vor.u32 1.1754944e-38, %v769
    %v771 = vsel %vm768, %v770, %v766
    %v772 = vmul.f32 %v618, %v771
    %v773 = vrcp.pop %v684
    %v774 = vmul.f32 %v684, %v773
    %v775 = vsub.f32 1.0, %v774
    %v776 = vmul.f32 %v773, %v775
    %v777 = vadd.f32 %v773, %v776
    %vm778 = vweird.f32 %v684
    %vm779 = vweird.f32 %v773
    %vm780 = vmor %vm778, %vm779
    %v781 = vsel %vm780, %v773, %v777
    %v782 = vand.u32 2147483647, %v684
    %vm783 = vcmp.eq.f32.partialorder %v782, 8.507059e+37
    %v784 = vand.u32 %v684, 2147483648
    %v785 = vor.u32 1.1754944e-38, %v784
    %v786 = vsel %vm783, %v785, %v781
    %v787 = vmul.f32 %v620, %v786
    %v788 = vrcp.pop %v686
    %v789 = vmul.f32 %v686, %v788
    %v790 = vsub.f32 1.0, %v789
    %v791 = vmul.f32 %v788, %v790
    %v792 = vadd.f32 %v788, %v791
    %vm793 = vweird.f32 %v686
    %vm794 = vweird.f32 %v788
    %vm795 = vmor %vm793, %vm794
    %v796 = vsel %vm795, %v788, %v792
    %v797 = vand.u32 2147483647, %v686
    %vm798 = vcmp.eq.f32.partialorder %v797, 8.507059e+37
    %v799 = vand.u32 %v686, 2147483648
    %v800 = vor.u32 1.1754944e-38, %v799
    %v801 = vsel %vm798, %v800, %v796
    %v802 = vmul.f32 %v622, %v801
    %v803 = vrcp.pop %v688
    %v804 = vmul.f32 %v688, %v803
    %v805 = vsub.f32 1.0, %v804
    %v806 = vmul.f32 %v803, %v805
    %v807 = vadd.f32 %v803, %v806
    %vm808 = vweird.f32 %v688
    %vm809 = vweird.f32 %v803
    %vm810 = vmor %vm808, %vm809
    %v811 = vsel %vm810, %v803, %v807
    %v812 = vand.u32 2147483647, %v688
    %vm813 = vcmp.eq.f32.partialorder %v812, 8.507059e+37
    %v814 = vand.u32 %v688, 2147483648
    %v815 = vor.u32 1.1754944e-38, %v814
    %v816 = vsel %vm813, %v815, %v811
    %v817 = vmul.f32 %v624, %v816
    %v818 = vrcp.pop %v690
    %v819 = vmul.f32 %v690, %v818
    %v820 = vsub.f32 1.0, %v819
    %v821 = vmul.f32 %v818, %v820
    %v822 = vadd.f32 %v818, %v821
    %vm823 = vweird.f32 %v690
    %vm824 = vweird.f32 %v818
    %vm825 = vmor %vm823, %vm824
    %v826 = vsel %vm825, %v818, %v822
    %v827 = vand.u32 2147483647, %v690
    %vm828 = vcmp.eq.f32.partialorder %v827, 8.507059e+37
    %v829 = vand.u32 %v690, 2147483648
    %v830 = vor.u32 1.1754944e-38, %v829
    %v831 = vsel %vm828, %v830, %v826
    %v832 = vmul.f32 %v626, %v831
    %v833 = vrcp.pop %v692
    %v834 = vmul.f32 %v692, %v833
    %v835 = vsub.f32 1.0, %v834
    %v836 = vmul.f32 %v833, %v835
    %v837 = vadd.f32 %v833, %v836
    %vm838 = vweird.f32 %v692
    %vm839 = vweird.f32 %v833
    %vm840 = vmor %vm838, %vm839
    %v841 = vsel %vm840, %v833, %v837
    %v842 = vand.u32 2147483647, %v692
    %vm843 = vcmp.eq.f32.partialorder %v842, 8.507059e+37
    %v844 = vand.u32 %v692, 2147483648
    %v845 = vor.u32 1.1754944e-38, %v844
    %v846 = vsel %vm843, %v845, %v841
    %v847 = vmul.f32 %v628, %v846
    %v848 = vrcp.pop %v694
    %v849 = vmul.f32 %v694, %v848
    %v850 = vsub.f32 1.0, %v849
    %v851 = vmul.f32 %v848, %v850
    %v852 = vadd.f32 %v848, %v851
    %vm853 = vweird.f32 %v694
    %vm854 = vweird.f32 %v848
    %vm855 = vmor %vm853, %vm854
    %v856 = vsel %vm855, %v848, %v852
    %v857 = vand.u32 2147483647, %v694
    %vm858 = vcmp.eq.f32.partialorder %v857, 8.507059e+37
    %v859 = vand.u32 %v694, 2147483648
    %v860 = vor.u32 1.1754944e-38, %v859
    %v861 = vsel %vm858, %v860, %v856
    %v862 = vmul.f32 %v630, %v861
    %v863 = vrcp.pop %v696
    %v864 = vmul.f32 %v696, %v863
    %v865 = vsub.f32 1.0, %v864
    %v866 = vmul.f32 %v863, %v865
    %v867 = vadd.f32 %v863, %v866
    %vm868 = vweird.f32 %v696
    %vm869 = vweird.f32 %v863
    %vm870 = vmor %vm868, %vm869
    %v871 = vsel %vm870, %v863, %v867
    %v872 = vand.u32 2147483647, %v696
    %vm873 = vcmp.eq.f32.partialorder %v872, 8.507059e+37
    %v874 = vand.u32 %v696, 2147483648
    %v875 = vor.u32 1.1754944e-38, %v874
    %v876 = vsel %vm873, %v875, %v871
    %v877 = vmul.f32 %v632, %v876
    %v878 = vrcp.pop %v698
    %v879 = vmul.f32 %v698, %v878
    %v880 = vsub.f32 1.0, %v879
    %v881 = vmul.f32 %v878, %v880
    %v882 = vadd.f32 %v878, %v881
    %vm883 = vweird.f32 %v698
    %vm884 = vweird.f32 %v878
    %vm885 = vmor %vm883, %vm884
    %v886 = vsel %vm885, %v878, %v882
    %v887 = vand.u32 2147483647, %v698
    %vm888 = vcmp.eq.f32.partialorder %v887, 8.507059e+37
    %v889 = vand.u32 %v698, 2147483648
    %v890 = vor.u32 1.1754944e-38, %v889
    %v891 = vsel %vm888, %v890, %v886
    %v892 = vmul.f32 %v634, %v891
    %v893 = vrcp.pop %v700
    %v894 = vmul.f32 %v700, %v893
    %v895 = vsub.f32 1.0, %v894
    %v896 = vmul.f32 %v893, %v895
    %v897 = vadd.f32 %v893, %v896
    %vm898 = vweird.f32 %v700
    %vm899 = vweird.f32 %v893
    %vm900 = vmor %vm898, %vm899
    %v901 = vsel %vm900, %v893, %v897
    %v902 = vand.u32 2147483647, %v700
    %vm903 = vcmp.eq.f32.partialorder %v902, 8.507059e+37
    %v904 = vand.u32 %v700, 2147483648
    %v905 = vor.u32 1.1754944e-38, %v904
    %v906 = vsel %vm903, %v905, %v901
    %v907 = vmul.f32 %v636, %v906
    %v908 = vrcp.pop %v702
    %v909 = vmul.f32 %v702, %v908
    %v910 = vsub.f32 1.0, %v909
    %v911 = vmul.f32 %v908, %v910
    %v912 = vadd.f32 %v908, %v911
    %vm913 = vweird.f32 %v702
    %vm914 = vweird.f32 %v908
    %vm915 = vmor %vm913, %vm914
    %v916 = vsel %vm915, %v908, %v912
    %v917 = vand.u32 2147483647, %v702
    %vm918 = vcmp.eq.f32.partialorder %v917, 8.507059e+37
    %v919 = vand.u32 %v702, 2147483648
    %v920 = vor.u32 1.1754944e-38, %v919
    %v921 = vsel %vm918, %v920, %v916
    %v922 = vmul.f32 %v638, %v921
    %v923 = vrcp.pop %v704
    %v924 = vmul.f32 %v704, %v923
    %v925 = vsub.f32 1.0, %v924
    %v926 = vmul.f32 %v923, %v925
    %v927 = vadd.f32 %v923, %v926
    %vm928 = vweird.f32 %v704
    %vm929 = vweird.f32 %v923
    %vm930 = vmor %vm928, %vm929
    %v931 = vsel %vm930, %v923, %v927
    %v932 = vand.u32 2147483647, %v704
    %vm933 = vcmp.eq.f32.partialorder %v932, 8.507059e+37
    %v934 = vand.u32 %v704, 2147483648
    %v935 = vor.u32 1.1754944e-38, %v934
    %v936 = vsel %vm933, %v935, %v931
    %v937 = vmul.f32 %v640, %v936
    %v938 = vrcp.pop %v706
    %v939 = vmul.f32 %v706, %v938
    %v940 = vsub.f32 1.0, %v939
    %v941 = vmul.f32 %v938, %v940
    %v942 = vadd.f32 %v938, %v941
    %vm943 = vweird.f32 %v706
    %vm944 = vweird.f32 %v938
    %vm945 = vmor %vm943, %vm944
    %v946 = vsel %vm945, %v938, %v942
    %v947 = vand.u32 2147483647, %v706
    %vm948 = vcmp.eq.f32.partialorder %v947, 8.507059e+37
    %v949 = vand.u32 %v706, 2147483648
    %v950 = vor.u32 1.1754944e-38, %v949
    %v951 = vsel %vm948, %v950, %v946
    %v952 = vmul.f32 %v642, %v951
    %v953 = vrcp.pop %v708
    %v954 = vmul.f32 %v708, %v953
    %v955 = vsub.f32 1.0, %v954
    %v956 = vmul.f32 %v953, %v955
    %v957 = vadd.f32 %v953, %v956
    %vm958 = vweird.f32 %v708
    %vm959 = vweird.f32 %v953
    %vm960 = vmor %vm958, %vm959
    %v961 = vsel %vm960, %v953, %v957
    %v962 = vand.u32 2147483647, %v708
    %vm963 = vcmp.eq.f32.partialorder %v962, 8.507059e+37
    %v964 = vand.u32 %v708, 2147483648
    %v965 = vor.u32 1.1754944e-38, %v964
    %v966 = vsel %vm963, %v965, %v961
    %v967 = vmul.f32 %v644, %v966
    %v968 = vrcp.pop %v710
    %v969 = vmul.f32 %v710, %v968
    %v970 = vsub.f32 1.0, %v969
    %v971 = vmul.f32 %v968, %v970
    %v972 = vadd.f32 %v968, %v971
    %vm973 = vweird.f32 %v710
    %vm974 = vweird.f32 %v968
    %vm975 = vmor %vm973, %vm974
    %v976 = vsel %vm975, %v968, %v972
    %v977 = vand.u32 2147483647, %v710
    %vm978 = vcmp.eq.f32.partialorder %v977, 8.507059e+37
    %v979 = vand.u32 %v710, 2147483648
    %v980 = vor.u32 1.1754944e-38, %v979
    %v981 = vsel %vm978, %v980, %v976
    %v982 = vmul.f32 %v646, %v981
    %v983 = vrcp.pop %v712
    %v984 = vmul.f32 %v712, %v983
    %v985 = vsub.f32 1.0, %v984
    %v986 = vmul.f32 %v983, %v985
    %v987 = vadd.f32 %v983, %v986
    %vm988 = vweird.f32 %v712
    %vm989 = vweird.f32 %v983
    %vm990 = vmor %vm988, %vm989
    %v991 = vsel %vm990, %v983, %v987
    %v992 = vand.u32 2147483647, %v712
    %vm993 = vcmp.eq.f32.partialorder %v992, 8.507059e+37
    %v994 = vand.u32 %v712, 2147483648
    %v995 = vor.u32 1.1754944e-38, %v994
    %v996 = vsel %vm993, %v995, %v991
    %v997 = vmul.f32 %v648, %v996
    %v998 = vrcp.pop %v714
    %v999 = vmul.f32 %v714, %v998
    %v1000 = vsub.f32 1.0, %v999
    %v1001 = vmul.f32 %v998, %v1000
    %v1002 = vadd.f32 %v998, %v1001
    %vm1003 = vweird.f32 %v714
    %vm1004 = vweird.f32 %v998
    %vm1005 = vmor %vm1003, %vm1004
    %v1006 = vsel %vm1005, %v998, %v1002
    %v1007 = vand.u32 2147483647, %v714
    %vm1008 = vcmp.eq.f32.partialorder %v1007, 8.507059e+37
    %v1009 = vand.u32 %v714, 2147483648
    %v1010 = vor.u32 1.1754944e-38, %v1009
    %v1011 = vsel %vm1008, %v1010, %v1006
    %v1012 = vmul.f32 %v650, %v1011
    %v1013 = vrcp.pop %v716
    %v1014 = vmul.f32 %v716, %v1013
    %v1015 = vsub.f32 1.0, %v1014
    %v1016 = vmul.f32 %v1013, %v1015
    %v1017 = vadd.f32 %v1013, %v1016
    %vm1018 = vweird.f32 %v716
    %vm1019 = vweird.f32 %v1013
    %vm1020 = vmor %vm1018, %vm1019
    %v1021 = vsel %vm1020, %v1013, %v1017
    %v1022 = vand.u32 2147483647, %v716
    %vm1023 = vcmp.eq.f32.partialorder %v1022, 8.507059e+37
    %v1024 = vand.u32 %v716, 2147483648
    %v1025 = vor.u32 1.1754944e-38, %v1024
    %v1026 = vsel %vm1023, %v1025, %v1021
    %v1027 = vmul.f32 %v652, %v1026
    %v1028 = vrcp.pop %v718
    %v1029 = vmul.f32 %v718, %v1028
    %v1030 = vsub.f32 1.0, %v1029
    %v1031 = vmul.f32 %v1028, %v1030
    %v1032 = vadd.f32 %v1028, %v1031
    %vm1033 = vweird.f32 %v718
    %vm1034 = vweird.f32 %v1028
    %vm1035 = vmor %vm1033, %vm1034
    %v1036 = vsel %vm1035, %v1028, %v1032
    %v1037 = vand.u32 2147483647, %v718
    %vm1038 = vcmp.eq.f32.partialorder %v1037, 8.507059e+37
    %v1039 = vand.u32 %v718, 2147483648
    %v1040 = vor.u32 1.1754944e-38, %v1039
    %v1041 = vsel %vm1038, %v1040, %v1036
    %v1042 = vmul.f32 %v654, %v1041
    %v1043 = vrcp.pop %v720
    %v1044 = vmul.f32 %v720, %v1043
    %v1045 = vsub.f32 1.0, %v1044
    %v1046 = vmul.f32 %v1043, %v1045
    %v1047 = vadd.f32 %v1043, %v1046
    %vm1048 = vweird.f32 %v720
    %vm1049 = vweird.f32 %v1043
    %vm1050 = vmor %vm1048, %vm1049
    %v1051 = vsel %vm1050, %v1043, %v1047
    %v1052 = vand.u32 2147483647, %v720
    %vm1053 = vcmp.eq.f32.partialorder %v1052, 8.507059e+37
    %v1054 = vand.u32 %v720, 2147483648
    %v1055 = vor.u32 1.1754944e-38, %v1054
    %v1056 = vsel %vm1053, %v1055, %v1051
    %v1057 = vmul.f32 %v656, %v1056
    %v1058 = vrcp.pop %v722
    %v1059 = vmul.f32 %v722, %v1058
    %v1060 = vsub.f32 1.0, %v1059
    %v1061 = vmul.f32 %v1058, %v1060
    %v1062 = vadd.f32 %v1058, %v1061
    %vm1063 = vweird.f32 %v722
    %vm1064 = vweird.f32 %v1058
    %vm1065 = vmor %vm1063, %vm1064
    %v1066 = vsel %vm1065, %v1058, %v1062
    %v1067 = vand.u32 2147483647, %v722
    %vm1068 = vcmp.eq.f32.partialorder %v1067, 8.507059e+37
    %v1069 = vand.u32 %v722, 2147483648
    %v1070 = vor.u32 1.1754944e-38, %v1069
    %v1071 = vsel %vm1068, %v1070, %v1066
    %v1072 = vmul.f32 %v658, %v1071
    %v1073 = vrcp.pop %v724
    %v1074 = vmul.f32 %v724, %v1073
    %v1075 = vsub.f32 1.0, %v1074
    %v1076 = vmul.f32 %v1073, %v1075
    %v1077 = vadd.f32 %v1073, %v1076
    %vm1078 = vweird.f32 %v724
    %vm1079 = vweird.f32 %v1073
    %vm1080 = vmor %vm1078, %vm1079
    %v1081 = vsel %vm1080, %v1073, %v1077
    %v1082 = vand.u32 2147483647, %v724
    %vm1083 = vcmp.eq.f32.partialorder %v1082, 8.507059e+37
    %v1084 = vand.u32 %v724, 2147483648
    %v1085 = vor.u32 1.1754944e-38, %v1084
    %v1086 = vsel %vm1083, %v1085, %v1081
    %v1087 = vmul.f32 %v660, %v1086
    %v1088 = vrcp.pop %v726
    %v1089 = vmul.f32 %v726, %v1088
    %v1090 = vsub.f32 1.0, %v1089
    %v1091 = vmul.f32 %v1088, %v1090
    %v1092 = vadd.f32 %v1088, %v1091
    %vm1093 = vweird.f32 %v726
    %vm1094 = vweird.f32 %v1088
    %vm1095 = vmor %vm1093, %vm1094
    %v1096 = vsel %vm1095, %v1088, %v1092
    %v1097 = vand.u32 2147483647, %v726
    %vm1098 = vcmp.eq.f32.partialorder %v1097, 8.507059e+37
    %v1099 = vand.u32 %v726, 2147483648
    %v1100 = vor.u32 1.1754944e-38, %v1099
    %v1101 = vsel %vm1098, %v1100, %v1096
    %v1102 = vmul.f32 %v662, %v1101
    %v1103 = vrcp.pop %v728
    %v1104 = vmul.f32 %v728, %v1103
    %v1105 = vsub.f32 1.0, %v1104
    %v1106 = vmul.f32 %v1103, %v1105
    %v1107 = vadd.f32 %v1103, %v1106
    %vm1108 = vweird.f32 %v728
    %vm1109 = vweird.f32 %v1103
    %vm1110 = vmor %vm1108, %vm1109
    %v1111 = vsel %vm1110, %v1103, %v1107
    %v1112 = vand.u32 2147483647, %v728
    %vm1113 = vcmp.eq.f32.partialorder %v1112, 8.507059e+37
    %v1114 = vand.u32 %v728, 2147483648
    %v1115 = vor.u32 1.1754944e-38, %v1114
    %v1116 = vsel %vm1113, %v1115, %v1111
    %v1117 = vmul.f32 %v664, %v1116
    %v1118 = vrcp.pop %v730
    %v1119 = vmul.f32 %v730, %v1118
    %v1120 = vsub.f32 1.0, %v1119
    %v1121 = vmul.f32 %v1118, %v1120
    %v1122 = vadd.f32 %v1118, %v1121
    %vm1123 = vweird.f32 %v730
    %vm1124 = vweird.f32 %v1118
    %vm1125 = vmor %vm1123, %vm1124
    %v1126 = vsel %vm1125, %v1118, %v1122
    %v1127 = vand.u32 2147483647, %v730
    %vm1128 = vcmp.eq.f32.partialorder %v1127, 8.507059e+37
    %v1129 = vand.u32 %v730, 2147483648
    %v1130 = vor.u32 1.1754944e-38, %v1129
    %v1131 = vsel %vm1128, %v1130, %v1126
    %v1132 = vmul.f32 %v666, %v1131
    %v1133 = vrcp.pop %v732
    %v1134 = vmul.f32 %v732, %v1133
    %v1135 = vsub.f32 1.0, %v1134
    %v1136 = vmul.f32 %v1133, %v1135
    %v1137 = vadd.f32 %v1133, %v1136
    %vm1138 = vweird.f32 %v732
    %vm1139 = vweird.f32 %v1133
    %vm1140 = vmor %vm1138, %vm1139
    %v1141 = vsel %vm1140, %v1133, %v1137
    %v1142 = vand.u32 2147483647, %v732
    %vm1143 = vcmp.eq.f32.partialorder %v1142, 8.507059e+37
    %v1144 = vand.u32 %v732, 2147483648
    %v1145 = vor.u32 1.1754944e-38, %v1144
    %v1146 = vsel %vm1143, %v1145, %v1141
    %v1147 = vmul.f32 %v668, %v1146
    %v1148 = vrcp.pop %v734
    %v1149 = vmul.f32 %v734, %v1148
    %v1150 = vsub.f32 1.0, %v1149
    %v1151 = vmul.f32 %v1148, %v1150
    %v1152 = vadd.f32 %v1148, %v1151
    %vm1153 = vweird.f32 %v734
    %vm1154 = vweird.f32 %v1148
    %vm1155 = vmor %vm1153, %vm1154
    %v1156 = vsel %vm1155, %v1148, %v1152
    %v1157 = vand.u32 2147483647, %v734
    %vm1158 = vcmp.eq.f32.partialorder %v1157, 8.507059e+37
    %v1159 = vand.u32 %v734, 2147483648
    %v1160 = vor.u32 1.1754944e-38, %v1159
    %v1161 = vsel %vm1158, %v1160, %v1156
    %v1162 = vmul.f32 %v670, %v1161
    %v1163 = vrcp.pop %v736
    %v1164 = vmul.f32 %v736, %v1163
    %v1165 = vsub.f32 1.0, %v1164
    %v1166 = vmul.f32 %v1163, %v1165
    %v1167 = vadd.f32 %v1163, %v1166
    %vm1168 = vweird.f32 %v736
    %vm1169 = vweird.f32 %v1163
    %vm1170 = vmor %vm1168, %vm1169
    %v1171 = vsel %vm1170, %v1163, %v1167
    %v1172 = vand.u32 2147483647, %v736
    %vm1173 = vcmp.eq.f32.partialorder %v1172, 8.507059e+37
    %v1174 = vand.u32 %v736, 2147483648
    %v1175 = vor.u32 1.1754944e-38, %v1174
    %v1176 = vsel %vm1173, %v1175, %v1171
    %v1177 = vmul.f32 %v672, %v1176
    %v1178 = vrcp.pop %v738
    %v1179 = vmul.f32 %v738, %v1178
    %v1180 = vsub.f32 1.0, %v1179
    %v1181 = vmul.f32 %v1178, %v1180
    %v1182 = vadd.f32 %v1178, %v1181
    %vm1183 = vweird.f32 %v738
    %vm1184 = vweird.f32 %v1178
    %vm1185 = vmor %vm1183, %vm1184
    %v1186 = vsel %vm1185, %v1178, %v1182
    %v1187 = vand.u32 2147483647, %v738
    %vm1188 = vcmp.eq.f32.partialorder %v1187, 8.507059e+37
    %v1189 = vand.u32 %v738, 2147483648
    %v1190 = vor.u32 1.1754944e-38, %v1189
    %v1191 = vsel %vm1188, %v1190, %v1186
    %v1192 = vmul.f32 %v674, %v1191
    %v1193 = vrcp.pop %v740
    %v1194 = vmul.f32 %v740, %v1193
    %v1195 = vsub.f32 1.0, %v1194
    %v1196 = vmul.f32 %v1193, %v1195
    %v1197 = vadd.f32 %v1193, %v1196
    %vm1198 = vweird.f32 %v740
    %vm1199 = vweird.f32 %v1193
    %vm1200 = vmor %vm1198, %vm1199
    %v1201 = vsel %vm1200, %v1193, %v1197
    %v1202 = vand.u32 2147483647, %v740
    %vm1203 = vcmp.eq.f32.partialorder %v1202, 8.507059e+37
    %v1204 = vand.u32 %v740, 2147483648
    %v1205 = vor.u32 1.1754944e-38, %v1204
    %v1206 = vsel %vm1203, %v1205, %v1201
    %v1207 = vmul.f32 %v676, %v1206
    %v1208 = vrcp.pop %v742
    %v1209 = vmul.f32 %v742, %v1208
    %v1210 = vsub.f32 1.0, %v1209
    %v1211 = vmul.f32 %v1208, %v1210
    %v1212 = vadd.f32 %v1208, %v1211
    %vm1213 = vweird.f32 %v742
    %vm1214 = vweird.f32 %v1208
    %vm1215 = vmor %vm1213, %vm1214
    %v1216 = vsel %vm1215, %v1208, %v1212
    %v1217 = vand.u32 2147483647, %v742
    %vm1218 = vcmp.eq.f32.partialorder %v1217, 8.507059e+37
    %v1219 = vand.u32 %v742, 2147483648
    %v1220 = vor.u32 1.1754944e-38, %v1219
    %v1221 = vsel %vm1218, %v1220, %v1216
    %v1222 = vmul.f32 %v678, %v1221
    %1223 = vst [vmem:[#allocation2] sm:$0xff] %v757
    %1224 = vst [vmem:[#allocation2 + $0x8] sm:$0xff] %v772
    %1225 = vst [vmem:[#allocation2 + $0x10] sm:$0xff] %v787
    %1226 = vst [vmem:[#allocation2 + $0x18] sm:$0xff] %v802
    %1227 = vst [vmem:[#allocation2 + $0x20] sm:$0xff] %v817
    %1228 = vst [vmem:[#allocation2 + $0x28] sm:$0xff] %v832
    %1229 = vst [vmem:[#allocation2 + $0x30] sm:$0xff] %v847
    %1230 = vst [vmem:[#allocation2 + $0x38] sm:$0xff] %v862
    %1231 = vst [vmem:[#allocation2 + $0x40] sm:$0xff] %v877
    %1232 = vst [vmem:[#allocation2 + $0x48] sm:$0xff] %v892
    %1233 = vst [vmem:[#allocation2 + $0x50] sm:$0xff] %v907
    %1234 = vst [vmem:[#allocation2 + $0x58] sm:$0xff] %v922
    %1235 = vst [vmem:[#allocation2 + $0x60] sm:$0xff] %v937
    %1236 = vst [vmem:[#allocation2 + $0x68] sm:$0xff] %v952
    %1237 = vst [vmem:[#allocation2 + $0x70] sm:$0xff] %v967
    %1238 = vst [vmem:[#allocation2 + $0x78] sm:$0xff] %v982
    %1239 = vst [vmem:[#allocation2 + $0x80] sm:$0xff] %v997
    %1240 = vst [vmem:[#allocation2 + $0x88] sm:$0xff] %v1012
    %1241 = vst [vmem:[#allocation2 + $0x90] sm:$0xff] %v1027
    %1242 = vst [vmem:[#allocation2 + $0x98] sm:$0xff] %v1042
    %1243 = vst [vmem:[#allocation2 + $0xa0] sm:$0xff] %v1057
    %1244 = vst [vmem:[#allocation2 + $0xa8] sm:$0xff] %v1072
    %1245 = vst [vmem:[#allocation2 + $0xb0] sm:$0xff] %v1087
    %1246 = vst [vmem:[#allocation2 + $0xb8] sm:$0xff] %v1102
    %1247 = vst [vmem:[#allocation2 + $0xc0] sm:$0xff] %v1117
    %1248 = vst [vmem:[#allocation2 + $0xc8] sm:$0xff] %v1132
    %1249 = vst [vmem:[#allocation2 + $0xd0] sm:$0xff] %v1147
    %1250 = vst [vmem:[#allocation2 + $0xd8] sm:$0xff] %v1162
    %1251 = vst [vmem:[#allocation2 + $0xe0] sm:$0xff] %v1177
    %1252 = vst [vmem:[#allocation2 + $0xe8] sm:$0xff] %v1192
    %1253 = vst [vmem:[#allocation2 + $0xf0] sm:$0xff] %v1207
    %1254 = vst [vmem:[#allocation2 + $0xf8] sm:$0xff] %v1222
    // Predicated region
    $region22: #{tpu_custom_call.1} parent=1 // pred_check
      _
    $region23: #{tpu_custom_call.1} parent=1 // pred_check_branch
      %1256 = sbr.rel (0) target = $region25
    $region24: #{tpu_custom_call.1} parent=1 // pred_region
      %1258 = vsyncadd [#allocation3], 0
      %s1259 = sshll.u32 [#allocation2], 4
      %s1260 = int_to_ptr.vmem [resolvable:$true] %s1259
      %s1261 = sshll.u32 %s5, 4
      %s1262 = int_to_ptr.hbm [resolvable:$true] %s1261
      %1267 = dma.vmem_to_hbm [thread:$0]  %s1260, 4096, %s1262, [#allocation3], 128, 128, 8
    $region25: #{tpu_custom_call.1} parent=1 // pred_fallthru
      _
    // Predicated region
    $region26: #{tpu_custom_call.1} parent=1 // pred_check
      _
    $region27: #{tpu_custom_call.1} parent=1 // pred_check_branch
      %1269 = sbr.rel (0) target = $region29
    $region28: #{tpu_custom_call.1} parent=1 // pred_region
      %1271 = dma.done [#allocation3], 4096
    $region29: #{tpu_custom_call.1} parent=1 // pred_fallthru
      _
    %1272 = vsyncpa [#allocation3], 1

</llo_original>
